<compile_context>
chip_gen: v5e
topology: v5e:2x2
jax: 0.10.0
libtpu: 0.0.40
codegen_flags: <defaults>
</compile_context>

<pallas_src>
import numpy as np
import jax
import jax.numpy as jnp
from jax.experimental import pallas as pl
from jax.experimental.pallas import tpu as pltpu  # noqa: F401  (imported per template)


# ----------------------------------------------------------------------------
# Parameter packing: all weights/biases -> one (rows, 128) f32 VMEM-friendly slab
# ----------------------------------------------------------------------------
def pack_params(params, shapes, fpn_size, batch):
    names = list(shapes)
    n = len(names)
    F, B = fpn_size, batch

    def rup8(v):
        return (v + 7) // 8 * 8

    # row offsets
    stage_meta, row = [], 0
    for name in names:
        C = shapes[name][2]
        assert C + F <= 128, "packed lane layout assumes C + fpn_size <= 128"
        stage_meta.append(dict(r0=row, C=C))
        row += rup8(C + 1)                    # C weight rows + 1 bias row, 8-aligned
    up_meta = []
    for i in range(1, n):
        L1, L0 = shapes[names[i]][1], shapes[names[i - 1]][1]
        if L1 == L0:
            up_meta.append(None)              # nn.Identity
        else:
            assert B * L1 + F <= 128, "packed lane layout assumes B*L_in + fpn_size <= 128"
            up_meta.append(dict(u0=row, L0=L0, L1=L1))
            row += rup8(B * L0)
    total_rows = rup8(row)

    buf = np.zeros((total_rows, 128), np.float32)
    for s, name in enumerate(names):
        m, p = stage_meta[s], params['Proj_' + name]
        r0, C = m['r0'], m['C']
        buf[r0:r0 + C, 0:C] = np.asarray(p['w1'])
        buf[r0:r0 + C, C:C + F] = np.asarray(p['w2'])
        buf[r0 + C, 0:C] = np.asarray(p['b1'])[0]
        buf[r0 + C, C:C + F] = np.asarray(p['b2'])[0]
    for i in range(1, n):
        m = up_meta[i - 1]
        if m is None:
            continue
        up = params['Up_' + names[i]]
        u0, L0, L1 = m['u0'], m['L0'], m['L1']
        w = np.asarray(up['w'])                                   # (L0, L1)
        wblk = np.zeros((B * L0, B * L1), np.float32)             # block-diag over batch
        for b in range(B):
            wblk[b * L0:(b + 1) * L0, b * L1:(b + 1) * L1] = w
        buf[u0:u0 + B * L0, 0:B * L1] = wblk
        bias = np.broadcast_to(np.asarray(up['b']), (L0, F))      # (L0,1) -> (L0,F)
        buf[u0:u0 + B * L0, B * L1:B * L1 + F] = np.tile(bias, (B, 1))

    meta = dict(stages=stage_meta, ups=up_meta, F=F, B=B,
                Ls=[shapes[name][1] for name in names])
    return jnp.asarray(buf), meta


# ----------------------------------------------------------------------------
# Fused single-step kernel (FPN structure fixed at trace time by `meta`)
# ----------------------------------------------------------------------------
def _make_fused_fpn_kernel(meta):
    n = len(meta['stages'])
    F, B = meta['F'], meta['B']

    def kernel(*refs):
        pk = refs[0]                     # packed params, (rows, 128) f32, VMEM resident
        x_refs = refs[1:1 + n]           # per-stage activations, (B*L_s, C_s)
        o_refs = refs[1 + n:]            # per-stage outputs,     (B*L_s, F)

        # 1) projections: Linear(C,C) -> ReLU -> Linear(C,F), whole batch at once
        feats = []
        for s in range(n):
            r0, C = meta['stages'][s]['r0'], meta['stages'][s]['C']
            x = x_refs[s][...]                                    # (B*L_s, C)
            w1 = pk[r0:r0 + C, 0:C]
            w2 = pk[r0:r0 + C, C:C + F]
            b1 = pk[r0 + C:r0 + C + 1, 0:C]
            b2 = pk[r0 + C:r0 + C + 1, C:C + F]
            h = jnp.maximum(jnp.dot(x, w1, preferred_element_type=jnp.float32) + b1, 0.0)
            feats.append(jnp.dot(h, w2, preferred_element_type=jnp.float32) + b2)

        # 2) top-down accumulation, entirely in VMEM / vregs
        for i in range(n - 1, 0, -1):
            m = meta['ups'][i - 1]
            if m is None:                                         # nn.Identity
                feats[i - 1] = feats[i - 1] + feats[i]
            else:                                                 # Conv1d(L_i, L_{i-1}, 1)
                u0, L0, L1 = m['u0'], m['L0'], m['L1']
                wblk = pk[u0:u0 + B * L0, 0:B * L1]               # block-diag, batch folded
                bias = pk[u0:u0 + B * L0, B * L1:B * L1 + F]      # pre-broadcast (B*L0, F)
                up = jnp.dot(wblk, feats[i],
                             preferred_element_type=jnp.float32) + bias
                feats[i - 1] = feats[i - 1] + up

        # 3) single writeback per stage
        for s in range(n):
            o_refs[s][...] = feats[s].astype(o_refs[s].dtype)

    return kernel


# ----------------------------------------------------------------------------
# FPN forward: one single-step pallas_call for the whole module
# ----------------------------------------------------------------------------
def fpn_forward(x, packed, meta):
    names = list(x)
    n = len(names)
    F, B, Ls = meta['F'], meta['B'], meta['Ls']

    args = [packed]
    for name in names:
        b, L, C = x[name].shape
        args.append(x[name].reshape(b * L, C))    # free XLA reshape; M = B*L in-kernel

    out_shape = tuple(jax.ShapeDtypeStruct((B * Ls[s], F), jnp.float32) for s in range(n))
    kernel = _make_fused_fpn_kernel(meta)

    # No grid: single invocation, full arrays as VMEM-resident blocks (≈0.5 MB total).
    outs = pl.pallas_call(kernel, out_shape=out_shape)(*args)
    return {name: outs[s].reshape(B, Ls[s], F) for s, name in enumerate(names)}


# ----------------------------------------------------------------------------
# Deterministic parameter init (synthetic; no checkpoint load)
# ----------------------------------------------------------------------------
def init_params(key, shapes, fpn_size):
    params = {}
    names = list(shapes)
    for i, name in enumerate(names):
        _, L, C = shapes[name]
        key, k1, k2, k3, k4 = jax.random.split(key, 5)
        params['Proj_' + name] = dict(
            w1=jax.random.normal(k1, (C, C), jnp.float32) / jnp.sqrt(C),
            b1=jax.random.normal(k2, (1, C), jnp.float32) * 0.01,
            w2=jax.random.normal(k3, (C, fpn_size), jnp.float32) / jnp.sqrt(C),
            b2=jax.random.normal(k4, (1, fpn_size), jnp.float32) * 0.01,
        )
        if i != 0:
            L_prev = shapes[names[i - 1]][1]
            if L != L_prev:
                key, k5, k6 = jax.random.split(key, 3)
                params['Up_' + name] = dict(
                    w=jax.random.normal(k5, (L_prev, L), jnp.float32) / jnp.sqrt(L),
                    b=jax.random.normal(k6, (L_prev, 1), jnp.float32) * 0.01,
                )
            else:
                params['Up_' + name] = None   # nn.Identity
    return params


# Plain-JAX reference for verification (mirrors the PyTorch module semantics)
def ref_forward(x, params):
    names = list(x)
    out = {}
    for name in names:
        p = params['Proj_' + name]
        h = jnp.maximum(x[name] @ p['w1'] + p['b1'][0], 0.0)
        out[name] = h @ p['w2'] + p['b2'][0]
    for i in range(len(names) - 1, 0, -1):
        x1n, x0n = names[i], names[i - 1]
        up = params['Up_' + x1n]
        x1 = out[x1n]
        if up is not None:
            x1 = jnp.einsum('ol,blf->bof', up['w'], x1) + up['b'][None, :, :]
        out[x0n] = x1 + out[x0n]
    return out


if __name__ == "__main__":
    key = jax.random.PRNGKey(0)
    fpn_size = 32
    # Swin-like multi-stage features: (B, L_tokens, C_channels)
    shapes = {
        "layer1": (2, 64, 16),
        "layer2": (2, 32, 32),
        "layer3": (2, 16, 64),
        "layer4": (2, 16, 96),   # same token count as layer3 -> exercises Identity path
    }
    B = shapes["layer1"][0]

    key, pkey = jax.random.split(key)
    params = init_params(pkey, shapes, fpn_size)
    packed, meta = pack_params(params, shapes, fpn_size, B)

    x = {}
    for name, shp in shapes.items():
        key, sub = jax.random.split(key)
        x[name] = jax.random.normal(sub, shp, jnp.float32)

    out = fpn_forward(dict(x), packed, meta)
    out = jax.tree_util.tree_map(jax.block_until_ready, out)

    ref = ref_forward(dict(x), params)
    for name in shapes:
        assert out[name].shape == (shapes[name][0], shapes[name][1], fpn_size)
        assert jnp.allclose(out[name], ref[name], atol=1e-4, rtol=1e-4), name

    print("KERNEL_OK")
</pallas_src>

<mosaic_0001>
module attributes {stable_mosaic.version = 11 : i64} {
  func.func @kernel(%arg0: memref<432x128xf32, #tpu.memory_space<vmem>>, %arg1: memref<128x16xf32, #tpu.memory_space<vmem>>, %arg2: memref<64x32xf32, #tpu.memory_space<vmem>>, %arg3: memref<32x64xf32, #tpu.memory_space<vmem>>, %arg4: memref<32x96xf32, #tpu.memory_space<vmem>>, %arg5: memref<128x32xf32, #tpu.memory_space<vmem>>, %arg6: memref<64x32xf32, #tpu.memory_space<vmem>>, %arg7: memref<32x32xf32, #tpu.memory_space<vmem>>, %arg8: memref<32x32xf32, #tpu.memory_space<vmem>>) attributes {dimension_semantics = [], scalar_prefetch = 0 : i64, scratch_operands = 0 : i64, tpu.core_type = #tpu.core_type<tc>} {
    %c0 = arith.constant 0 : index
    %c0_0 = arith.constant 0 : index
    %0 = vector.load %arg1[%c0, %c0_0] : memref<128x16xf32, #tpu.memory_space<vmem>>, vector<128x16xf32>
    %c0_1 = arith.constant 0 : index
    %c0_2 = arith.constant 0 : index
    %1 = vector.load %arg0[%c0_1, %c0_2] : memref<432x128xf32, #tpu.memory_space<vmem>>, vector<16x16xf32>
    %c0_3 = arith.constant 0 : index
    %c16 = arith.constant 16 : index
    %2 = vector.load %arg0[%c0_3, %c16] : memref<432x128xf32, #tpu.memory_space<vmem>>, vector<16x32xf32>
    %c16_4 = arith.constant 16 : index
    %c0_5 = arith.constant 0 : index
    %3 = vector.load %arg0[%c16_4, %c0_5] : memref<432x128xf32, #tpu.memory_space<vmem>>, vector<1x16xf32>
    %c16_6 = arith.constant 16 : index
    %c16_7 = arith.constant 16 : index
    %4 = vector.load %arg0[%c16_6, %c16_7] : memref<432x128xf32, #tpu.memory_space<vmem>>, vector<1x32xf32>
    %cst = arith.constant dense<0.000000e+00> : vector<128x16xf32>
    %5 = tpu.matmul %0, %1, %cst {dimension_numbers = #tpu.dot_dimension_numbers<[1], [0], [0], [1], [0, 0, 1, 1], [], []>} : vector<128x16xf32>, vector<16x16xf32>, vector<128x16xf32> -> vector<128x16xf32>
    %6 = vector.broadcast %3 : vector<1x16xf32> to vector<128x16xf32>
    %7 = arith.addf %5, %6 : vector<128x16xf32>
    %cst_8 = arith.constant 0.000000e+00 : f32
    %8 = vector.broadcast %cst_8 : f32 to vector<128x16xf32>
    %9 = arith.maximumf %7, %8 : vector<128x16xf32>
    %cst_9 = arith.constant dense<0.000000e+00> : vector<128x32xf32>
    %10 = tpu.matmul %9, %2, %cst_9 {dimension_numbers = #tpu.dot_dimension_numbers<[1], [0], [0], [1], [0, 0, 1, 1], [], []>} : vector<128x16xf32>, vector<16x32xf32>, vector<128x32xf32> -> vector<128x32xf32>
    %11 = vector.broadcast %4 : vector<1x32xf32> to vector<128x32xf32>
    %12 = arith.addf %10, %11 : vector<128x32xf32>
    %c0_10 = arith.constant 0 : index
    %c0_11 = arith.constant 0 : index
    %13 = vector.load %arg2[%c0_10, %c0_11] : memref<64x32xf32, #tpu.memory_space<vmem>>, vector<64x32xf32>
    %c24 = arith.constant 24 : index
    %c0_12 = arith.constant 0 : index
    %14 = vector.load %arg0[%c24, %c0_12] : memref<432x128xf32, #tpu.memory_space<vmem>>, vector<32x32xf32>
    %c24_13 = arith.constant 24 : index
    %c32 = arith.constant 32 : index
    %15 = vector.load %arg0[%c24_13, %c32] : memref<432x128xf32, #tpu.memory_space<vmem>>, vector<32x32xf32>
    %c56 = arith.constant 56 : index
    %c0_14 = arith.constant 0 : index
    %16 = vector.load %arg0[%c56, %c0_14] : memref<432x128xf32, #tpu.memory_space<vmem>>, vector<1x32xf32>
    %c56_15 = arith.constant 56 : index
    %c32_16 = arith.constant 32 : index
    %17 = vector.load %arg0[%c56_15, %c32_16] : memref<432x128xf32, #tpu.memory_space<vmem>>, vector<1x32xf32>
    %cst_17 = arith.constant dense<0.000000e+00> : vector<64x32xf32>
    %18 = tpu.matmul %13, %14, %cst_17 {dimension_numbers = #tpu.dot_dimension_numbers<[1], [0], [0], [1], [0, 0, 1, 1], [], []>} : vector<64x32xf32>, vector<32x32xf32>, vector<64x32xf32> -> vector<64x32xf32>
    %19 = vector.broadcast %16 : vector<1x32xf32> to vector<64x32xf32>
    %20 = arith.addf %18, %19 : vector<64x32xf32>
    %cst_18 = arith.constant 0.000000e+00 : f32
    %21 = vector.broadcast %cst_18 : f32 to vector<64x32xf32>
    %22 = arith.maximumf %20, %21 : vector<64x32xf32>
    %cst_19 = arith.constant dense<0.000000e+00> : vector<64x32xf32>
    %23 = tpu.matmul %22, %15, %cst_19 {dimension_numbers = #tpu.dot_dimension_numbers<[1], [0], [0], [1], [0, 0, 1, 1], [], []>} : vector<64x32xf32>, vector<32x32xf32>, vector<64x32xf32> -> vector<64x32xf32>
    %24 = vector.broadcast %17 : vector<1x32xf32> to vector<64x32xf32>
    %25 = arith.addf %23, %24 : vector<64x32xf32>
    %c0_20 = arith.constant 0 : index
    %c0_21 = arith.constant 0 : index
    %26 = vector.load %arg3[%c0_20, %c0_21] : memref<32x64xf32, #tpu.memory_space<vmem>>, vector<32x64xf32>
    %c64 = arith.constant 64 : index
    %c0_22 = arith.constant 0 : index
    %27 = vector.load %arg0[%c64, %c0_22] : memref<432x128xf32, #tpu.memory_space<vmem>>, vector<64x64xf32>
    %c64_23 = arith.constant 64 : index
    %c64_24 = arith.constant 64 : index
    %28 = vector.load %arg0[%c64_23, %c64_24] : memref<432x128xf32, #tpu.memory_space<vmem>>, vector<64x32xf32>
    %c128 = arith.constant 128 : index
    %c0_25 = arith.constant 0 : index
    %29 = vector.load %arg0[%c128, %c0_25] : memref<432x128xf32, #tpu.memory_space<vmem>>, vector<1x64xf32>
    %c128_26 = arith.constant 128 : index
    %c64_27 = arith.constant 64 : index
    %30 = vector.load %arg0[%c128_26, %c64_27] : memref<432x128xf32, #tpu.memory_space<vmem>>, vector<1x32xf32>
    %cst_28 = arith.constant dense<0.000000e+00> : vector<32x64xf32>
    %31 = tpu.matmul %26, %27, %cst_28 {dimension_numbers = #tpu.dot_dimension_numbers<[1], [0], [0], [1], [0, 0, 1, 1], [], []>} : vector<32x64xf32>, vector<64x64xf32>, vector<32x64xf32> -> vector<32x64xf32>
    %32 = vector.broadcast %29 : vector<1x64xf32> to vector<32x64xf32>
    %33 = arith.addf %31, %32 : vector<32x64xf32>
    %cst_29 = arith.constant 0.000000e+00 : f32
    %34 = vector.broadcast %cst_29 : f32 to vector<32x64xf32>
    %35 = arith.maximumf %33, %34 : vector<32x64xf32>
    %cst_30 = arith.constant dense<0.000000e+00> : vector<32x32xf32>
    %36 = tpu.matmul %35, %28, %cst_30 {dimension_numbers = #tpu.dot_dimension_numbers<[1], [0], [0], [1], [0, 0, 1, 1], [], []>} : vector<32x64xf32>, vector<64x32xf32>, vector<32x32xf32> -> vector<32x32xf32>
    %37 = vector.broadcast %30 : vector<1x32xf32> to vector<32x32xf32>
    %38 = arith.addf %36, %37 : vector<32x32xf32>
    %c0_31 = arith.constant 0 : index
    %c0_32 = arith.constant 0 : index
    %39 = vector.load %arg4[%c0_31, %c0_32] : memref<32x96xf32, #tpu.memory_space<vmem>>, vector<32x96xf32>
    %c136 = arith.constant 136 : index
    %c0_33 = arith.constant 0 : index
    %40 = vector.load %arg0[%c136, %c0_33] : memref<432x128xf32, #tpu.memory_space<vmem>>, vector<96x96xf32>
    %c136_34 = arith.constant 136 : index
    %c96 = arith.constant 96 : index
    %41 = vector.load %arg0[%c136_34, %c96] : memref<432x128xf32, #tpu.memory_space<vmem>>, vector<96x32xf32>
    %c232 = arith.constant 232 : index
    %c0_35 = arith.constant 0 : index
    %42 = vector.load %arg0[%c232, %c0_35] : memref<432x128xf32, #tpu.memory_space<vmem>>, vector<1x96xf32>
    %c232_36 = arith.constant 232 : index
    %c96_37 = arith.constant 96 : index
    %43 = vector.load %arg0[%c232_36, %c96_37] : memref<432x128xf32, #tpu.memory_space<vmem>>, vector<1x32xf32>
    %cst_38 = arith.constant dense<0.000000e+00> : vector<32x96xf32>
    %44 = tpu.matmul %39, %40, %cst_38 {dimension_numbers = #tpu.dot_dimension_numbers<[1], [0], [0], [1], [0, 0, 1, 1], [], []>} : vector<32x96xf32>, vector<96x96xf32>, vector<32x96xf32> -> vector<32x96xf32>
    %45 = vector.broadcast %42 : vector<1x96xf32> to vector<32x96xf32>
    %46 = arith.addf %44, %45 : vector<32x96xf32>
    %cst_39 = arith.constant 0.000000e+00 : f32
    %47 = vector.broadcast %cst_39 : f32 to vector<32x96xf32>
    %48 = arith.maximumf %46, %47 : vector<32x96xf32>
    %cst_40 = arith.constant dense<0.000000e+00> : vector<32x32xf32>
    %49 = tpu.matmul %48, %41, %cst_40 {dimension_numbers = #tpu.dot_dimension_numbers<[1], [0], [0], [1], [0, 0, 1, 1], [], []>} : vector<32x96xf32>, vector<96x32xf32>, vector<32x32xf32> -> vector<32x32xf32>
    %50 = vector.broadcast %43 : vector<1x32xf32> to vector<32x32xf32>
    %51 = arith.addf %49, %50 : vector<32x32xf32>
    %52 = arith.addf %38, %51 : vector<32x32xf32>
    %c368 = arith.constant 368 : index
    %c0_41 = arith.constant 0 : index
    %53 = vector.load %arg0[%c368, %c0_41] : memref<432x128xf32, #tpu.memory_space<vmem>>, vector<64x32xf32>
    %c368_42 = arith.constant 368 : index
    %c32_43 = arith.constant 32 : index
    %54 = vector.load %arg0[%c368_42, %c32_43] : memref<432x128xf32, #tpu.memory_space<vmem>>, vector<64x32xf32>
    %cst_44 = arith.constant dense<0.000000e+00> : vector<64x32xf32>
    %55 = tpu.matmul %53, %52, %cst_44 {dimension_numbers = #tpu.dot_dimension_numbers<[1], [0], [0], [1], [0, 0, 1, 1], [], []>} : vector<64x32xf32>, vector<32x32xf32>, vector<64x32xf32> -> vector<64x32xf32>
    %56 = arith.addf %55, %54 : vector<64x32xf32>
    %57 = arith.addf %25, %56 : vector<64x32xf32>
    %c240 = arith.constant 240 : index
    %c0_45 = arith.constant 0 : index
    %58 = vector.load %arg0[%c240, %c0_45] : memref<432x128xf32, #tpu.memory_space<vmem>>, vector<128x64xf32>
    %c240_46 = arith.constant 240 : index
    %c64_47 = arith.constant 64 : index
    %59 = vector.load %arg0[%c240_46, %c64_47] : memref<432x128xf32, #tpu.memory_space<vmem>>, vector<128x32xf32>
    %cst_48 = arith.constant dense<0.000000e+00> : vector<128x32xf32>
    %60 = tpu.matmul %58, %57, %cst_48 {dimension_numbers = #tpu.dot_dimension_numbers<[1], [0], [0], [1], [0, 0, 1, 1], [], []>} : vector<128x64xf32>, vector<64x32xf32>, vector<128x32xf32> -> vector<128x32xf32>
    %61 = arith.addf %60, %59 : vector<128x32xf32>
    %62 = arith.addf %12, %61 : vector<128x32xf32>
    %c0_49 = arith.constant 0 : index
    %c0_50 = arith.constant 0 : index
    %63 = vector.load %arg5[%c0_49, %c0_50] : memref<128x32xf32, #tpu.memory_space<vmem>>, vector<128x32xf32>
    tpu.vector_store %arg5[%c0_49, %c0_50], %62 {strides = array<i32>} : memref<128x32xf32, #tpu.memory_space<vmem>>, vector<128x32xf32>,
    %c0_51 = arith.constant 0 : index
    %c0_52 = arith.constant 0 : index
    %64 = vector.load %arg6[%c0_51, %c0_52] : memref<64x32xf32, #tpu.memory_space<vmem>>, vector<64x32xf32>
    tpu.vector_store %arg6[%c0_51, %c0_52], %57 {strides = array<i32>} : memref<64x32xf32, #tpu.memory_space<vmem>>, vector<64x32xf32>,
    %c0_53 = arith.constant 0 : index
    %c0_54 = arith.constant 0 : index
    %65 = vector.load %arg7[%c0_53, %c0_54] : memref<32x32xf32, #tpu.memory_space<vmem>>, vector<32x32xf32>
    tpu.vector_store %arg7[%c0_53, %c0_54], %52 {strides = array<i32>} : memref<32x32xf32, #tpu.memory_space<vmem>>, vector<32x32xf32>,
    %c0_55 = arith.constant 0 : index
    %c0_56 = arith.constant 0 : index
    %66 = vector.load %arg8[%c0_55, %c0_56] : memref<32x32xf32, #tpu.memory_space<vmem>>, vector<32x32xf32>
    tpu.vector_store %arg8[%c0_55, %c0_56], %51 {strides = array<i32>} : memref<32x32xf32, #tpu.memory_space<vmem>>, vector<32x32xf32>,
    return
  }
}

</mosaic_0001>

<llo_original>
// kernel: tpu_custom_call.1
$region0: #{tpu_custom_call.1}
  #allocation0 [shape = 'u32[]', space=smem, size = 0x4, offset = 0x4, fixed_abs, tag = 'smem constant byte address 0x4 - core index']
  #allocation1 [shape = 'u32[72,128]{1,0:T(1,128)}', space=vmem, size = 0x9000, scoped, tag = 'internal scratch']
  %s0 = inlined_call_operand.hbm [shape: f32[432,128], index: 0, kind: input, shape index: {}]
  %s1 = inlined_call_operand.vmem [shape: f32[128,16], index: 1, kind: input, shape index: {}]
  %s2 = inlined_call_operand.vmem [shape: f32[64,32], index: 2, kind: input, shape index: {}]
  %s3 = inlined_call_operand.vmem [shape: f32[32,64], index: 3, kind: input, shape index: {}]
  %s4 = inlined_call_operand.vmem [shape: f32[32,96], index: 4, kind: input, shape index: {}]
  %s5 = inlined_call_operand.vmem [shape: f32[128,32], index: 5, kind: output, shape index: {0}]
  %s6 = inlined_call_operand.vmem [shape: f32[64,32], index: 6, kind: output, shape index: {1}]
  %s7 = inlined_call_operand.hbm [shape: f32[32,32], index: 7, kind: output, shape index: {2}]
  %s8 = inlined_call_operand.hbm [shape: f32[32,32], index: 8, kind: output, shape index: {3}]
  %9 = xla_tuple %s5, %s6, %s7, %s8
  %s10 = sld [smem:[#allocation0]]
  $region58: #{tpu_custom_call.1} parent=0
    _
  %s12 = ssub.s32 1, %s10
  %s13 = scalar_select 0, %s12, %s10
  $region1: #{tpu_custom_call.1} parent=0
    #allocation2 [shape = 'u8[221184]{0}', space=vmem, size = 0x36000, scoped, tag = 'input window, operand 0, single buffered']
    #allocation3 [shape = 's32[1]{0}', space=sflag, size = 0x4, scoped, tag = 'scoped memory for tpu_custom_call.1']
    #allocation4 [shape = 's32[1]{0}', space=sflag, size = 0x4, scoped, tag = 'scoped memory for tpu_custom_call.1']
    #allocation5 [shape = 'u8[16384]{0}', space=vmem, size = 0x4000, scoped, tag = 'output window, operand 2, single buffered']
    #allocation6 [shape = 'u8[16384]{0}', space=vmem, size = 0x4000, scoped, tag = 'output window, operand 3, single buffered']
    #allocation7 [shape = 's32[1]{0}', space=sflag, size = 0x4, scoped, tag = 'scoped memory for tpu_custom_call.1']
    %14 = vsyncpa [#allocation3], 0
    %15 = vsyncpa [#allocation4], 0
    %16 = vsyncpa [#allocation7], 0
    // Predicated region
    $region2: #{tpu_custom_call.1} parent=1 // pred_check
      _
    $region3: #{tpu_custom_call.1} parent=1 // pred_check_branch
      %18 = sbr.rel (0) target = $region5
    $region4: #{tpu_custom_call.1} parent=1 // pred_region
      %20 = vsyncadd [#allocation3], 0
      %s21 = sshll.u32 %s0, 4
      %s22 = int_to_ptr.hbm [resolvable:$true] %s21
      %s23 = sshll.u32 [#allocation2], 4
      %s24 = int_to_ptr.vmem [resolvable:$true] %s23
      %29 = dma.hbm_to_vmem [thread:$0]  %s22, 6912, %s24, [#allocation3], 128, 128, 8
    $region5: #{tpu_custom_call.1} parent=1 // pred_fallthru
      _
    // Predicated region
    $region6: #{tpu_custom_call.1} parent=1 // pred_check
      _
    $region7: #{tpu_custom_call.1} parent=1 // pred_check_branch
      %31 = sbr.rel (0) target = $region9
    $region8: #{tpu_custom_call.1} parent=1 // pred_region
      _
    $region9: #{tpu_custom_call.1} parent=1 // pred_fallthru
      _
    // Predicated region
    $region10: #{tpu_custom_call.1} parent=1 // pred_check
      _
    $region11: #{tpu_custom_call.1} parent=1 // pred_check_branch
      %33 = sbr.rel (0) target = $region13
    $region12: #{tpu_custom_call.1} parent=1 // pred_region
      _
    $region13: #{tpu_custom_call.1} parent=1 // pred_fallthru
      _
    // Predicated region
    $region14: #{tpu_custom_call.1} parent=1 // pred_check
      _
    $region15: #{tpu_custom_call.1} parent=1 // pred_check_branch
      %35 = sbr.rel (0) target = $region17
    $region16: #{tpu_custom_call.1} parent=1 // pred_region
      _
    $region17: #{tpu_custom_call.1} parent=1 // pred_fallthru
      _
    // Predicated region
    $region18: #{tpu_custom_call.1} parent=1 // pred_check
      _
    $region19: #{tpu_custom_call.1} parent=1 // pred_check_branch
      %37 = sbr.rel (0) target = $region21
    $region20: #{tpu_custom_call.1} parent=1 // pred_region
      _
    $region21: #{tpu_custom_call.1} parent=1 // pred_fallthru
      _
    // Predicated region
    $region22: #{tpu_custom_call.1} parent=1 // pred_check
      _
    $region23: #{tpu_custom_call.1} parent=1 // pred_check_branch
      %39 = sbr.rel (0) target = $region25
    $region24: #{tpu_custom_call.1} parent=1 // pred_region
      %41 = dma.done [#allocation3], 6912
    $region25: #{tpu_custom_call.1} parent=1 // pred_fallthru
      _
    %v42 = vld [vmem:[%s1] sm:$0xff]
    %v43 = vld [vmem:[%s1 + $0x8] sm:$0xff]
    %v44 = vld [vmem:[%s1 + $0x10] sm:$0xff]
    %v45 = vld [vmem:[%s1 + $0x18] sm:$0xff]
    %v46 = vld [vmem:[%s1 + $0x20] sm:$0xff]
    %v47 = vld [vmem:[%s1 + $0x28] sm:$0xff]
    %v48 = vld [vmem:[%s1 + $0x30] sm:$0xff]
    %v49 = vld [vmem:[%s1 + $0x38] sm:$0xff]
    %v50 = vld [vmem:[%s1 + $0x40] sm:$0xff]
    %v51 = vld [vmem:[%s1 + $0x48] sm:$0xff]
    %v52 = vld [vmem:[%s1 + $0x50] sm:$0xff]
    %v53 = vld [vmem:[%s1 + $0x58] sm:$0xff]
    %v54 = vld [vmem:[%s1 + $0x60] sm:$0xff]
    %v55 = vld [vmem:[%s1 + $0x68] sm:$0xff]
    %v56 = vld [vmem:[%s1 + $0x70] sm:$0xff]
    %v57 = vld [vmem:[%s1 + $0x78] sm:$0xff]
    %v58 = vld [vmem:[#allocation2] sm:$0xff]
    %v59 = vld [vmem:[#allocation2 + $0x8] sm:$0xff]
    %v60 = vld [vmem:[#allocation2 + $0x10] sm:$0x1]
    %v61 = vperm.slane %v60, 0
    %vm62 = vcmask 130048
    %v64 = vsel %vm62, %v42, 0
    %v67 = vsel %vm62, %v43, 0
    %v70 = vsel %vm62, %v44, 0
    %v73 = vsel %vm62, %v45, 0
    %v76 = vsel %vm62, %v46, 0
    %v79 = vsel %vm62, %v47, 0
    %v82 = vsel %vm62, %v48, 0
    %v85 = vsel %vm62, %v49, 0
    %v88 = vsel %vm62, %v50, 0
    %v91 = vsel %vm62, %v51, 0
    %v94 = vsel %vm62, %v52, 0
    %v97 = vsel %vm62, %v53, 0
    %v100 = vsel %vm62, %v54, 0
    %v103 = vsel %vm62, %v55, 0
    %v106 = vsel %vm62, %v56, 0
    %v109 = vsel %vm62, %v57, 0
    %111 = vmatpush.msra.mxu0 0.0
    %112 = vmatpush.msra.mxu0 0.0
    %113 = vmatpush.msra.mxu0 0.0
    %114 = vmatpush.msra.mxu0 0.0
    %115 = vmatpush.msra.mxu0 0.0
    %116 = vmatpush.msra.mxu0 0.0
    %117 = vmatpush.msra.mxu0 0.0
    %118 = vmatpush.msra.mxu0 0.0
    %119 = vmatpush.msra.mxu0 0.0
    %120 = vmatpush.msra.mxu0 0.0
    %121 = vmatpush.msra.mxu0 0.0
    %122 = vmatpush.msra.mxu0 0.0
    %123 = vmatpush.msra.mxu0 0.0
    %124 = vmatpush.msra.mxu0 0.0
    %125 = vmatpush.msra.mxu0 %v59
    %126 = vmatpush.msra.mxu0 %v58
    %127 = vmatmul.f32.gmra.mxu0 %v64
    %v128 = vpop.f32.mrf.mxu0
    %v129 = vadd.f32 %v61, %v128
    %130 = vmatmul.f32.gmra.mxu0 %v67
    %v131 = vpop.f32.mrf.mxu0
    %v132 = vadd.f32 %v61, %v131
    %133 = vmatmul.f32.gmra.mxu0 %v70
    %v134 = vpop.f32.mrf.mxu0
    %v135 = vadd.f32 %v61, %v134
    %136 = vmatmul.f32.gmra.mxu0 %v73
    %v137 = vpop.f32.mrf.mxu0
    %v138 = vadd.f32 %v61, %v137
    %139 = vmatmul.f32.gmra.mxu0 %v76
    %v140 = vpop.f32.mrf.mxu0
    %v141 = vadd.f32 %v61, %v140
    %142 = vmatmul.f32.gmra.mxu0 %v79
    %v143 = vpop.f32.mrf.mxu0
    %v144 = vadd.f32 %v61, %v143
    %145 = vmatmul.f32.gmra.mxu0 %v82
    %v146 = vpop.f32.mrf.mxu0
    %v147 = vadd.f32 %v61, %v146
    %148 = vmatmul.f32.gmra.mxu0 %v85
    %v149 = vpop.f32.mrf.mxu0
    %v150 = vadd.f32 %v61, %v149
    %151 = vmatmul.f32.gmra.mxu0 %v88
    %v152 = vpop.f32.mrf.mxu0
    %v153 = vadd.f32 %v61, %v152
    %154 = vmatmul.f32.gmra.mxu0 %v91
    %v155 = vpop.f32.mrf.mxu0
    %v156 = vadd.f32 %v61, %v155
    %157 = vmatmul.f32.gmra.mxu0 %v94
    %v158 = vpop.f32.mrf.mxu0
    %v159 = vadd.f32 %v61, %v158
    %160 = vmatmul.f32.gmra.mxu0 %v97
    %v161 = vpop.f32.mrf.mxu0
    %v162 = vadd.f32 %v61, %v161
    %163 = vmatmul.f32.gmra.mxu0 %v100
    %v164 = vpop.f32.mrf.mxu0
    %v165 = vadd.f32 %v61, %v164
    %166 = vmatmul.f32.gmra.mxu0 %v103
    %v167 = vpop.f32.mrf.mxu0
    %v168 = vadd.f32 %v61, %v167
    %169 = vmatmul.f32.gmra.mxu0 %v106
    %v170 = vpop.f32.mrf.mxu0
    %v171 = vadd.f32 %v61, %v170
    %172 = vmatmul.f32.gmra.mxu0 %v109
    %v173 = vpop.f32.mrf.mxu0
    %v174 = vadd.f32 %v61, %v173
    %175 = vdwg.mxu0
    %v176 = vmax.f32 %v129, 0.0
    %v177 = vmax.f32 %v132, 0.0
    %v178 = vmax.f32 %v135, 0.0
    %v179 = vmax.f32 %v138, 0.0
    %v180 = vmax.f32 %v141, 0.0
    %v181 = vmax.f32 %v144, 0.0
    %v182 = vmax.f32 %v147, 0.0
    %v183 = vmax.f32 %v150, 0.0
    %v184 = vmax.f32 %v153, 0.0
    %v185 = vmax.f32 %v156, 0.0
    %v186 = vmax.f32 %v159, 0.0
    %v187 = vmax.f32 %v162, 0.0
    %v188 = vmax.f32 %v165, 0.0
    %v189 = vmax.f32 %v168, 0.0
    %v190 = vmax.f32 %v171, 0.0
    %v191 = vmax.f32 %v174, 0.0
    %194 = vrot.lane.b32.xlu0 %v58, 112
    %v195 = vpop.permute.xlu0 %194
    %196 = vrot.lane.b32.xlu0 %v59, 112
    %v197 = vpop.permute.xlu0 %196
    %201 = vrot.lane.b32.xlu0 %v61, 112
    %v202 = vpop.permute.xlu0 %201
    %v205 = vsel %vm62, %v176, 0
    %v208 = vsel %vm62, %v177, 0
    %v211 = vsel %vm62, %v178, 0
    %v214 = vsel %vm62, %v179, 0
    %v217 = vsel %vm62, %v180, 0
    %v220 = vsel %vm62, %v181, 0
    %v223 = vsel %vm62, %v182, 0
    %v226 = vsel %vm62, %v183, 0
    %v229 = vsel %vm62, %v184, 0
    %v232 = vsel %vm62, %v185, 0
    %v235 = vsel %vm62, %v186, 0
    %v238 = vsel %vm62, %v187, 0
    %v241 = vsel %vm62, %v188, 0
    %v244 = vsel %vm62, %v189, 0
    %v247 = vsel %vm62, %v190, 0
    %v250 = vsel %vm62, %v191, 0
    %252 = vmatpush.msra.mxu0 0.0
    %253 = vmatpush.msra.mxu0 0.0
    %254 = vmatpush.msra.mxu0 0.0
    %255 = vmatpush.msra.mxu0 0.0
    %256 = vmatpush.msra.mxu0 0.0
    %257 = vmatpush.msra.mxu0 0.0
    %258 = vmatpush.msra.mxu0 0.0
    %259 = vmatpush.msra.mxu0 0.0
    %260 = vmatpush.msra.mxu0 0.0
    %261 = vmatpush.msra.mxu0 0.0
    %262 = vmatpush.msra.mxu0 0.0
    %263 = vmatpush.msra.mxu0 0.0
    %264 = vmatpush.msra.mxu0 0.0
    %265 = vmatpush.msra.mxu0 0.0
    %266 = vmatpush.msra.mxu0 %v197
    %267 = vmatpush.msra.mxu0 %v195
    %268 = vmatmul.f32.gmra.mxu0 %v205
    %v269 = vpop.f32.mrf.mxu0
    %v270 = vadd.f32 %v202, %v269
    %271 = vmatmul.f32.gmra.mxu0 %v208
    %v272 = vpop.f32.mrf.mxu0
    %v273 = vadd.f32 %v202, %v272
    %274 = vmatmul.f32.gmra.mxu0 %v211
    %v275 = vpop.f32.mrf.mxu0
    %v276 = vadd.f32 %v202, %v275
    %277 = vmatmul.f32.gmra.mxu0 %v214
    %v278 = vpop.f32.mrf.mxu0
    %v279 = vadd.f32 %v202, %v278
    %280 = vmatmul.f32.gmra.mxu0 %v217
    %v281 = vpop.f32.mrf.mxu0
    %v282 = vadd.f32 %v202, %v281
    %283 = vmatmul.f32.gmra.mxu0 %v220
    %v284 = vpop.f32.mrf.mxu0
    %v285 = vadd.f32 %v202, %v284
    %286 = vmatmul.f32.gmra.mxu0 %v223
    %v287 = vpop.f32.mrf.mxu0
    %v288 = vadd.f32 %v202, %v287
    %289 = vmatmul.f32.gmra.mxu0 %v226
    %v290 = vpop.f32.mrf.mxu0
    %v291 = vadd.f32 %v202, %v290
    %292 = vmatmul.f32.gmra.mxu0 %v229
    %v293 = vpop.f32.mrf.mxu0
    %v294 = vadd.f32 %v202, %v293
    %295 = vmatmul.f32.gmra.mxu0 %v232
    %v296 = vpop.f32.mrf.mxu0
    %v297 = vadd.f32 %v202, %v296
    %298 = vmatmul.f32.gmra.mxu0 %v235
    %v299 = vpop.f32.mrf.mxu0
    %v300 = vadd.f32 %v202, %v299
    %301 = vmatmul.f32.gmra.mxu0 %v238
    %v302 = vpop.f32.mrf.mxu0
    %v303 = vadd.f32 %v202, %v302
    %304 = vmatmul.f32.gmra.mxu0 %v241
    %v305 = vpop.f32.mrf.mxu0
    %v306 = vadd.f32 %v202, %v305
    %307 = vmatmul.f32.gmra.mxu0 %v244
    %v308 = vpop.f32.mrf.mxu0
    %v309 = vadd.f32 %v202, %v308
    %310 = vmatmul.f32.gmra.mxu0 %v247
    %v311 = vpop.f32.mrf.mxu0
    %v312 = vadd.f32 %v202, %v311
    %313 = vmatmul.f32.gmra.mxu0 %v250
    %v314 = vpop.f32.mrf.mxu0
    %v315 = vadd.f32 %v202, %v314
    %316 = vdwg.mxu0
    %v317 = vld [vmem:[%s2] sm:$0xff]
    %v318 = vld [vmem:[%s2 + $0x8] sm:$0xff]
    %v319 = vld [vmem:[%s2 + $0x10] sm:$0xff]
    %v320 = vld [vmem:[%s2 + $0x18] sm:$0xff]
    %v321 = vld [vmem:[%s2 + $0x20] sm:$0xff]
    %v322 = vld [vmem:[%s2 + $0x28] sm:$0xff]
    %v323 = vld [vmem:[%s2 + $0x30] sm:$0xff]
    %v324 = vld [vmem:[%s2 + $0x38] sm:$0xff]
    %v325 = vld [vmem:[#allocation2 + $0x18] sm:$0xff]
    %v326 = vld [vmem:[#allocation2 + $0x20] sm:$0xff]
    %v327 = vld [vmem:[#allocation2 + $0x28] sm:$0xff]
    %v328 = vld [vmem:[#allocation2 + $0x30] sm:$0xff]
    %v329 = vld [vmem:[#allocation2 + $0x38] sm:$0x1]
    %v330 = vperm.slane %v329, 0
    %vm331 = vcmask 261120
    %v333 = vsel %vm331, %v317, 0
    %v336 = vsel %vm331, %v318, 0
    %v339 = vsel %vm331, %v319, 0
    %v342 = vsel %vm331, %v320, 0
    %v345 = vsel %vm331, %v321, 0
    %v348 = vsel %vm331, %v322, 0
    %v351 = vsel %vm331, %v323, 0
    %v354 = vsel %vm331, %v324, 0
    %356 = vmatpush.msra.mxu0 0.0
    %357 = vmatpush.msra.mxu0 0.0
    %358 = vmatpush.msra.mxu0 0.0
    %359 = vmatpush.msra.mxu0 0.0
    %360 = vmatpush.msra.mxu0 0.0
    %361 = vmatpush.msra.mxu0 0.0
    %362 = vmatpush.msra.mxu0 0.0
    %363 = vmatpush.msra.mxu0 0.0
    %364 = vmatpush.msra.mxu0 0.0
    %365 = vmatpush.msra.mxu0 0.0
    %366 = vmatpush.msra.mxu0 0.0
    %367 = vmatpush.msra.mxu0 0.0
    %368 = vmatpush.msra.mxu0 %v328
    %369 = vmatpush.msra.mxu0 %v327
    %370 = vmatpush.msra.mxu0 %v326
    %371 = vmatpush.msra.mxu0 %v325
    %372 = vmatmul.f32.gmra.mxu0 %v333
    %v373 = vpop.f32.mrf.mxu0
    %v374 = vadd.f32 %v330, %v373
    %375 = vmatmul.f32.gmra.mxu0 %v336
    %v376 = vpop.f32.mrf.mxu0
    %v377 = vadd.f32 %v330, %v376
    %378 = vmatmul.f32.gmra.mxu0 %v339
    %v379 = vpop.f32.mrf.mxu0
    %v380 = vadd.f32 %v330, %v379
    %381 = vmatmul.f32.gmra.mxu0 %v342
    %v382 = vpop.f32.mrf.mxu0
    %v383 = vadd.f32 %v330, %v382
    %384 = vmatmul.f32.gmra.mxu0 %v345
    %v385 = vpop.f32.mrf.mxu0
    %v386 = vadd.f32 %v330, %v385
    %387 = vmatmul.f32.gmra.mxu0 %v348
    %v388 = vpop.f32.mrf.mxu0
    %v389 = vadd.f32 %v330, %v388
    %390 = vmatmul.f32.gmra.mxu0 %v351
    %v391 = vpop.f32.mrf.mxu0
    %v392 = vadd.f32 %v330, %v391
    %393 = vmatmul.f32.gmra.mxu0 %v354
    %v394 = vpop.f32.mrf.mxu0
    %v395 = vadd.f32 %v330, %v394
    %396 = vdwg.mxu0
    %v397 = vmax.f32 %v374, 0.0
    %v398 = vmax.f32 %v377, 0.0
    %v399 = vmax.f32 %v380, 0.0
    %v400 = vmax.f32 %v383, 0.0
    %v401 = vmax.f32 %v386, 0.0
    %v402 = vmax.f32 %v389, 0.0
    %v403 = vmax.f32 %v392, 0.0
    %v404 = vmax.f32 %v395, 0.0
    %409 = vrot.lane.b32.xlu0 %v325, 96
    %v410 = vpop.permute.xlu0 %409
    %411 = vrot.lane.b32.xlu0 %v326, 96
    %v412 = vpop.permute.xlu0 %411
    %413 = vrot.lane.b32.xlu0 %v327, 96
    %v414 = vpop.permute.xlu0 %413
    %415 = vrot.lane.b32.xlu0 %v328, 96
    %v416 = vpop.permute.xlu0 %415
    %422 = vrot.lane.b32.xlu0 %v330, 96
    %v423 = vpop.permute.xlu0 %422
    %v426 = vsel %vm331, %v397, 0
    %v429 = vsel %vm331, %v398, 0
    %v432 = vsel %vm331, %v399, 0
    %v435 = vsel %vm331, %v400, 0
    %v438 = vsel %vm331, %v401, 0
    %v441 = vsel %vm331, %v402, 0
    %v444 = vsel %vm331, %v403, 0
    %v447 = vsel %vm331, %v404, 0
    %449 = vmatpush.msra.mxu0 0.0
    %450 = vmatpush.msra.mxu0 0.0
    %451 = vmatpush.msra.mxu0 0.0
    %452 = vmatpush.msra.mxu0 0.0
    %453 = vmatpush.msra.mxu0 0.0
    %454 = vmatpush.msra.mxu0 0.0
    %455 = vmatpush.msra.mxu0 0.0
    %456 = vmatpush.msra.mxu0 0.0
    %457 = vmatpush.msra.mxu0 0.0
    %458 = vmatpush.msra.mxu0 0.0
    %459 = vmatpush.msra.mxu0 0.0
    %460 = vmatpush.msra.mxu0 0.0
    %461 = vmatpush.msra.mxu0 %v416
    %462 = vmatpush.msra.mxu0 %v414
    %463 = vmatpush.msra.mxu0 %v412
    %464 = vmatpush.msra.mxu0 %v410
    %465 = vmatmul.f32.gmra.mxu0 %v426
    %v466 = vpop.f32.mrf.mxu0
    %v467 = vadd.f32 %v423, %v466
    %468 = vmatmul.f32.gmra.mxu0 %v429
    %v469 = vpop.f32.mrf.mxu0
    %v470 = vadd.f32 %v423, %v469
    %471 = vmatmul.f32.gmra.mxu0 %v432
    %v472 = vpop.f32.mrf.mxu0
    %v473 = vadd.f32 %v423, %v472
    %474 = vmatmul.f32.gmra.mxu0 %v435
    %v475 = vpop.f32.mrf.mxu0
    %v476 = vadd.f32 %v423, %v475
    %477 = vmatmul.f32.gmra.mxu0 %v438
    %v478 = vpop.f32.mrf.mxu0
    %v479 = vadd.f32 %v423, %v478
    %480 = vmatmul.f32.gmra.mxu0 %v441
    %v481 = vpop.f32.mrf.mxu0
    %v482 = vadd.f32 %v423, %v481
    %483 = vmatmul.f32.gmra.mxu0 %v444
    %v484 = vpop.f32.mrf.mxu0
    %v485 = vadd.f32 %v423, %v484
    %486 = vmatmul.f32.gmra.mxu0 %v447
    %v487 = vpop.f32.mrf.mxu0
    %v488 = vadd.f32 %v423, %v487
    %489 = vdwg.mxu0
    %v490 = vld [vmem:[%s3] sm:$0xff]
    %v491 = vld [vmem:[%s3 + $0x8] sm:$0xff]
    %v492 = vld [vmem:[%s3 + $0x10] sm:$0xff]
    %v493 = vld [vmem:[%s3 + $0x18] sm:$0xff]
    %v494 = vld [vmem:[#allocation2 + $0x40] sm:$0xff]
    %v495 = vld [vmem:[#allocation2 + $0x48] sm:$0xff]
    %v496 = vld [vmem:[#allocation2 + $0x50] sm:$0xff]
    %v497 = vld [vmem:[#allocation2 + $0x58] sm:$0xff]
    %v498 = vld [vmem:[#allocation2 + $0x60] sm:$0xff]
    %v499 = vld [vmem:[#allocation2 + $0x68] sm:$0xff]
    %v500 = vld [vmem:[#allocation2 + $0x70] sm:$0xff]
    %v501 = vld [vmem:[#allocation2 + $0x78] sm:$0xff]
    %v502 = vld [vmem:[#allocation2 + $0x80] sm:$0x1]
    %v503 = vperm.slane %v502, 0
    %vm504 = vcmask 523264
    %v506 = vsel %vm504, %v490, 0
    %v509 = vsel %vm504, %v491, 0
    %v512 = vsel %vm504, %v492, 0
    %v515 = vsel %vm504, %v493, 0
    %517 = vmatpush.msra.mxu0 0.0
    %518 = vmatpush.msra.mxu0 0.0
    %519 = vmatpush.msra.mxu0 0.0
    %520 = vmatpush.msra.mxu0 0.0
    %521 = vmatpush.msra.mxu0 0.0
    %522 = vmatpush.msra.mxu0 0.0
    %523 = vmatpush.msra.mxu0 0.0
    %524 = vmatpush.msra.mxu0 0.0
    %525 = vmatpush.msra.mxu0 %v501
    %526 = vmatpush.msra.mxu0 %v500
    %527 = vmatpush.msra.mxu0 %v499
    %528 = vmatpush.msra.mxu0 %v498
    %529 = vmatpush.msra.mxu0 %v497
    %530 = vmatpush.msra.mxu0 %v496
    %531 = vmatpush.msra.mxu0 %v495
    %532 = vmatpush.msra.mxu0 %v494
    %533 = vmatmul.f32.gmra.mxu0 %v506
    %v534 = vpop.f32.mrf.mxu0
    %v535 = vadd.f32 %v503, %v534
    %536 = vmatmul.f32.gmra.mxu0 %v509
    %v537 = vpop.f32.mrf.mxu0
    %v538 = vadd.f32 %v503, %v537
    %539 = vmatmul.f32.gmra.mxu0 %v512
    %v540 = vpop.f32.mrf.mxu0
    %v541 = vadd.f32 %v503, %v540
    %542 = vmatmul.f32.gmra.mxu0 %v515
    %v543 = vpop.f32.mrf.mxu0
    %v544 = vadd.f32 %v503, %v543
    %545 = vdwg.mxu0
    %v546 = vmax.f32 %v535, 0.0
    %v547 = vmax.f32 %v538, 0.0
    %v548 = vmax.f32 %v541, 0.0
    %v549 = vmax.f32 %v544, 0.0
    %558 = vrot.lane.b32.xlu0 %v494, 64
    %v559 = vpop.permute.xlu0 %558
    %560 = vrot.lane.b32.xlu0 %v495, 64
    %v561 = vpop.permute.xlu0 %560
    %562 = vrot.lane.b32.xlu0 %v496, 64
    %v563 = vpop.permute.xlu0 %562
    %564 = vrot.lane.b32.xlu0 %v497, 64
    %v565 = vpop.permute.xlu0 %564
    %566 = vrot.lane.b32.xlu0 %v498, 64
    %v567 = vpop.permute.xlu0 %566
    %568 = vrot.lane.b32.xlu0 %v499, 64
    %v569 = vpop.permute.xlu0 %568
    %570 = vrot.lane.b32.xlu0 %v500, 64
    %v571 = vpop.permute.xlu0 %570
    %572 = vrot.lane.b32.xlu0 %v501, 64
    %v573 = vpop.permute.xlu0 %572
    %583 = vrot.lane.b32.xlu0 %v503, 64
    %v584 = vpop.permute.xlu0 %583
    %v587 = vsel %vm504, %v546, 0
    %v590 = vsel %vm504, %v547, 0
    %v593 = vsel %vm504, %v548, 0
    %v596 = vsel %vm504, %v549, 0
    %598 = vmatpush.msra.mxu0 0.0
    %599 = vmatpush.msra.mxu0 0.0
    %600 = vmatpush.msra.mxu0 0.0
    %601 = vmatpush.msra.mxu0 0.0
    %602 = vmatpush.msra.mxu0 0.0
    %603 = vmatpush.msra.mxu0 0.0
    %604 = vmatpush.msra.mxu0 0.0
    %605 = vmatpush.msra.mxu0 0.0
    %606 = vmatpush.msra.mxu0 %v573
    %607 = vmatpush.msra.mxu0 %v571
    %608 = vmatpush.msra.mxu0 %v569
    %609 = vmatpush.msra.mxu0 %v567
    %610 = vmatpush.msra.mxu0 %v565
    %611 = vmatpush.msra.mxu0 %v563
    %612 = vmatpush.msra.mxu0 %v561
    %613 = vmatpush.msra.mxu0 %v559
    %614 = vmatmul.f32.gmra.mxu0 %v587
    %v615 = vpop.f32.mrf.mxu0
    %v616 = vadd.f32 %v584, %v615
    %617 = vmatmul.f32.gmra.mxu0 %v590
    %v618 = vpop.f32.mrf.mxu0
    %v619 = vadd.f32 %v584, %v618
    %620 = vmatmul.f32.gmra.mxu0 %v593
    %v621 = vpop.f32.mrf.mxu0
    %v622 = vadd.f32 %v584, %v621
    %623 = vmatmul.f32.gmra.mxu0 %v596
    %v624 = vpop.f32.mrf.mxu0
    %v625 = vadd.f32 %v584, %v624
    %626 = vdwg.mxu0
    %v627 = vld [vmem:[%s4] sm:$0xff]
    %v628 = vld [vmem:[%s4 + $0x8] sm:$0xff]
    %v629 = vld [vmem:[%s4 + $0x10] sm:$0xff]
    %v630 = vld [vmem:[%s4 + $0x18] sm:$0xff]
    %v631 = vld [vmem:[#allocation2 + $0x88] sm:$0xff]
    %v632 = vld [vmem:[#allocation2 + $0x90] sm:$0xff]
    %v633 = vld [vmem:[#allocation2 + $0x98] sm:$0xff]
    %v634 = vld [vmem:[#allocation2 + $0xa0] sm:$0xff]
    %v635 = vld [vmem:[#allocation2 + $0xa8] sm:$0xff]
    %v636 = vld [vmem:[#allocation2 + $0xb0] sm:$0xff]
    %v637 = vld [vmem:[#allocation2 + $0xb8] sm:$0xff]
    %v638 = vld [vmem:[#allocation2 + $0xc0] sm:$0xff]
    %v639 = vld [vmem:[#allocation2 + $0xc8] sm:$0xff]
    %v640 = vld [vmem:[#allocation2 + $0xd0] sm:$0xff]
    %v641 = vld [vmem:[#allocation2 + $0xd8] sm:$0xff]
    %v642 = vld [vmem:[#allocation2 + $0xe0] sm:$0xff]
    %v643 = vld [vmem:[#allocation2 + $0xe8] sm:$0x1]
    %v644 = vperm.slane %v643, 0
    %vm645 = vcmask 785408
    %v647 = vsel %vm645, %v627, 0
    %v650 = vsel %vm645, %v628, 0
    %v653 = vsel %vm645, %v629, 0
    %v656 = vsel %vm645, %v630, 0
    %658 = vmatpush.msra.mxu0 0.0
    %659 = vmatpush.msra.mxu0 0.0
    %660 = vmatpush.msra.mxu0 0.0
    %661 = vmatpush.msra.mxu0 0.0
    %662 = vmatpush.msra.mxu0 %v642
    %663 = vmatpush.msra.mxu0 %v641
    %664 = vmatpush.msra.mxu0 %v640
    %665 = vmatpush.msra.mxu0 %v639
    %666 = vmatpush.msra.mxu0 %v638
    %667 = vmatpush.msra.mxu0 %v637
    %668 = vmatpush.msra.mxu0 %v636
    %669 = vmatpush.msra.mxu0 %v635
    %670 = vmatpush.msra.mxu0 %v634
    %671 = vmatpush.msra.mxu0 %v633
    %672 = vmatpush.msra.mxu0 %v632
    %673 = vmatpush.msra.mxu0 %v631
    %674 = vmatmul.f32.gmra.mxu0 %v647
    %v675 = vpop.f32.mrf.mxu0
    %v676 = vadd.f32 %v644, %v675
    %677 = vmatmul.f32.gmra.mxu0 %v650
    %v678 = vpop.f32.mrf.mxu0
    %v679 = vadd.f32 %v644, %v678
    %680 = vmatmul.f32.gmra.mxu0 %v653
    %v681 = vpop.f32.mrf.mxu0
    %v682 = vadd.f32 %v644, %v681
    %683 = vmatmul.f32.gmra.mxu0 %v656
    %v684 = vpop.f32.mrf.mxu0
    %v685 = vadd.f32 %v644, %v684
    %686 = vdwg.mxu0
    %v687 = vmax.f32 %v676, 0.0
    %v688 = vmax.f32 %v679, 0.0
    %v689 = vmax.f32 %v682, 0.0
    %v690 = vmax.f32 %v685, 0.0
    %703 = vrot.lane.b32.xlu0 %v631, 32
    %v704 = vpop.permute.xlu0 %703
    %705 = vrot.lane.b32.xlu0 %v632, 32
    %v706 = vpop.permute.xlu0 %705
    %707 = vrot.lane.b32.xlu0 %v633, 32
    %v708 = vpop.permute.xlu0 %707
    %709 = vrot.lane.b32.xlu0 %v634, 32
    %v710 = vpop.permute.xlu0 %709
    %711 = vrot.lane.b32.xlu0 %v635, 32
    %v712 = vpop.permute.xlu0 %711
    %713 = vrot.lane.b32.xlu0 %v636, 32
    %v714 = vpop.permute.xlu0 %713
    %715 = vrot.lane.b32.xlu0 %v637, 32
    %v716 = vpop.permute.xlu0 %715
    %717 = vrot.lane.b32.xlu0 %v638, 32
    %v718 = vpop.permute.xlu0 %717
    %719 = vrot.lane.b32.xlu0 %v639, 32
    %v720 = vpop.permute.xlu0 %719
    %721 = vrot.lane.b32.xlu0 %v640, 32
    %v722 = vpop.permute.xlu0 %721
    %723 = vrot.lane.b32.xlu0 %v641, 32
    %v724 = vpop.permute.xlu0 %723
    %725 = vrot.lane.b32.xlu0 %v642, 32
    %v726 = vpop.permute.xlu0 %725
    %740 = vrot.lane.b32.xlu0 %v644, 32
    %v741 = vpop.permute.xlu0 %740
    %v744 = vsel %vm645, %v687, 0
    %v747 = vsel %vm645, %v688, 0
    %v750 = vsel %vm645, %v689, 0
    %v753 = vsel %vm645, %v690, 0
    %755 = vmatpush.msra.mxu0 0.0
    %756 = vmatpush.msra.mxu0 0.0
    %757 = vmatpush.msra.mxu0 0.0
    %758 = vmatpush.msra.mxu0 0.0
    %759 = vmatpush.msra.mxu0 %v726
    %760 = vmatpush.msra.mxu0 %v724
    %761 = vmatpush.msra.mxu0 %v722
    %762 = vmatpush.msra.mxu0 %v720
    %763 = vmatpush.msra.mxu0 %v718
    %764 = vmatpush.msra.mxu0 %v716
    %765 = vmatpush.msra.mxu0 %v714
    %766 = vmatpush.msra.mxu0 %v712
    %767 = vmatpush.msra.mxu0 %v710
    %768 = vmatpush.msra.mxu0 %v708
    %769 = vmatpush.msra.mxu0 %v706
    %770 = vmatpush.msra.mxu0 %v704
    %771 = vmatmul.f32.gmra.mxu0 %v744
    %v772 = vpop.f32.mrf.mxu0
    %v773 = vadd.f32 %v741, %v772
    %774 = vmatmul.f32.gmra.mxu0 %v747
    %v775 = vpop.f32.mrf.mxu0
    %v776 = vadd.f32 %v741, %v775
    %777 = vmatmul.f32.gmra.mxu0 %v750
    %v778 = vpop.f32.mrf.mxu0
    %v779 = vadd.f32 %v741, %v778
    %780 = vmatmul.f32.gmra.mxu0 %v753
    %v781 = vpop.f32.mrf.mxu0
    %v782 = vadd.f32 %v741, %v781
    %783 = vdwg.mxu0
    %v784 = vadd.f32 %v616, %v773
    %v785 = vadd.f32 %v619, %v776
    %v786 = vadd.f32 %v622, %v779
    %v787 = vadd.f32 %v625, %v782
    %v788 = vld [vmem:[#allocation2 + $0x170] sm:$0xff]
    %v789 = vld [vmem:[#allocation2 + $0x178] sm:$0xff]
    %v790 = vld [vmem:[#allocation2 + $0x180] sm:$0xff]
    %v791 = vld [vmem:[#allocation2 + $0x188] sm:$0xff]
    %v792 = vld [vmem:[#allocation2 + $0x190] sm:$0xff]
    %v793 = vld [vmem:[#allocation2 + $0x198] sm:$0xff]
    %v794 = vld [vmem:[#allocation2 + $0x1a0] sm:$0xff]
    %v795 = vld [vmem:[#allocation2 + $0x1a8] sm:$0xff]
    %804 = vrot.lane.b32.xlu0 %v788, 96
    %v805 = vpop.permute.xlu0 %804
    %806 = vrot.lane.b32.xlu0 %v789, 96
    %v807 = vpop.permute.xlu0 %806
    %808 = vrot.lane.b32.xlu0 %v790, 96
    %v809 = vpop.permute.xlu0 %808
    %810 = vrot.lane.b32.xlu0 %v791, 96
    %v811 = vpop.permute.xlu0 %810
    %812 = vrot.lane.b32.xlu0 %v792, 96
    %v813 = vpop.permute.xlu0 %812
    %814 = vrot.lane.b32.xlu0 %v793, 96
    %v815 = vpop.permute.xlu0 %814
    %816 = vrot.lane.b32.xlu0 %v794, 96
    %v817 = vpop.permute.xlu0 %816
    %818 = vrot.lane.b32.xlu0 %v795, 96
    %v819 = vpop.permute.xlu0 %818
    %v828 = vsel %vm331, %v788, 0
    %v830 = vsel %vm331, %v789, 0
    %v832 = vsel %vm331, %v790, 0
    %v834 = vsel %vm331, %v791, 0
    %v836 = vsel %vm331, %v792, 0
    %v838 = vsel %vm331, %v793, 0
    %v840 = vsel %vm331, %v794, 0
    %v842 = vsel %vm331, %v795, 0
    %844 = vmatpush.msra.mxu0 0.0
    %845 = vmatpush.msra.mxu0 0.0
    %846 = vmatpush.msra.mxu0 0.0
    %847 = vmatpush.msra.mxu0 0.0
    %848 = vmatpush.msra.mxu0 0.0
    %849 = vmatpush.msra.mxu0 0.0
    %850 = vmatpush.msra.mxu0 0.0
    %851 = vmatpush.msra.mxu0 0.0
    %852 = vmatpush.msra.mxu0 0.0
    %853 = vmatpush.msra.mxu0 0.0
    %854 = vmatpush.msra.mxu0 0.0
    %855 = vmatpush.msra.mxu0 0.0
    %856 = vmatpush.msra.mxu0 %v787
    %857 = vmatpush.msra.mxu0 %v786
    %858 = vmatpush.msra.mxu0 %v785
    %859 = vmatpush.msra.mxu0 %v784
    %860 = vmatmul.f32.gmra.mxu0 %v828
    %v861 = vpop.f32.mrf.mxu0
    %v862 = vadd.f32 %v805, %v861
    %863 = vmatmul.f32.gmra.mxu0 %v830
    %v864 = vpop.f32.mrf.mxu0
    %v865 = vadd.f32 %v807, %v864
    %866 = vmatmul.f32.gmra.mxu0 %v832
    %v867 = vpop.f32.mrf.mxu0
    %v868 = vadd.f32 %v809, %v867
    %869 = vmatmul.f32.gmra.mxu0 %v834
    %v870 = vpop.f32.mrf.mxu0
    %v871 = vadd.f32 %v811, %v870
    %872 = vmatmul.f32.gmra.mxu0 %v836
    %v873 = vpop.f32.mrf.mxu0
    %v874 = vadd.f32 %v813, %v873
    %875 = vmatmul.f32.gmra.mxu0 %v838
    %v876 = vpop.f32.mrf.mxu0
    %v877 = vadd.f32 %v815, %v876
    %878 = vmatmul.f32.gmra.mxu0 %v840
    %v879 = vpop.f32.mrf.mxu0
    %v880 = vadd.f32 %v817, %v879
    %881 = vmatmul.f32.gmra.mxu0 %v842
    %v882 = vpop.f32.mrf.mxu0
    %v883 = vadd.f32 %v819, %v882
    %884 = vdwg.mxu0
    %v885 = vadd.f32 %v467, %v862
    %v886 = vadd.f32 %v470, %v865
    %v887 = vadd.f32 %v473, %v868
    %v888 = vadd.f32 %v476, %v871
    %v889 = vadd.f32 %v479, %v874
    %v890 = vadd.f32 %v482, %v877
    %v891 = vadd.f32 %v485, %v880
    %v892 = vadd.f32 %v488, %v883
    %v893 = vld [vmem:[#allocation2 + $0xf0] sm:$0xff]
    %v894 = vld [vmem:[#allocation2 + $0xf8] sm:$0xff]
    %v895 = vld [vmem:[#allocation2 + $0x100] sm:$0xff]
    %v896 = vld [vmem:[#allocation2 + $0x108] sm:$0xff]
    %v897 = vld [vmem:[#allocation2 + $0x110] sm:$0xff]
    %v898 = vld [vmem:[#allocation2 + $0x118] sm:$0xff]
    %v899 = vld [vmem:[#allocation2 + $0x120] sm:$0xff]
    %v900 = vld [vmem:[#allocation2 + $0x128] sm:$0xff]
    %v901 = vld [vmem:[#allocation2 + $0x130] sm:$0xff]
    %v902 = vld [vmem:[#allocation2 + $0x138] sm:$0xff]
    %v903 = vld [vmem:[#allocation2 + $0x140] sm:$0xff]
    %v904 = vld [vmem:[#allocation2 + $0x148] sm:$0xff]
    %v905 = vld [vmem:[#allocation2 + $0x150] sm:$0xff]
    %v906 = vld [vmem:[#allocation2 + $0x158] sm:$0xff]
    %v907 = vld [vmem:[#allocation2 + $0x160] sm:$0xff]
    %v908 = vld [vmem:[#allocation2 + $0x168] sm:$0xff]
    %925 = vrot.lane.b32.xlu0 %v893, 64
    %v926 = vpop.permute.xlu0 %925
    %927 = vrot.lane.b32.xlu0 %v894, 64
    %v928 = vpop.permute.xlu0 %927
    %929 = vrot.lane.b32.xlu0 %v895, 64
    %v930 = vpop.permute.xlu0 %929
    %931 = vrot.lane.b32.xlu0 %v896, 64
    %v932 = vpop.permute.xlu0 %931
    %933 = vrot.lane.b32.xlu0 %v897, 64
    %v934 = vpop.permute.xlu0 %933
    %935 = vrot.lane.b32.xlu0 %v898, 64
    %v936 = vpop.permute.xlu0 %935
    %937 = vrot.lane.b32.xlu0 %v899, 64
    %v938 = vpop.permute.xlu0 %937
    %939 = vrot.lane.b32.xlu0 %v900, 64
    %v940 = vpop.permute.xlu0 %939
    %941 = vrot.lane.b32.xlu0 %v901, 64
    %v942 = vpop.permute.xlu0 %941
    %943 = vrot.lane.b32.xlu0 %v902, 64
    %v944 = vpop.permute.xlu0 %943
    %945 = vrot.lane.b32.xlu0 %v903, 64
    %v946 = vpop.permute.xlu0 %945
    %947 = vrot.lane.b32.xlu0 %v904, 64
    %v948 = vpop.permute.xlu0 %947
    %949 = vrot.lane.b32.xlu0 %v905, 64
    %v950 = vpop.permute.xlu0 %949
    %951 = vrot.lane.b32.xlu0 %v906, 64
    %v952 = vpop.permute.xlu0 %951
    %953 = vrot.lane.b32.xlu0 %v907, 64
    %v954 = vpop.permute.xlu0 %953
    %955 = vrot.lane.b32.xlu0 %v908, 64
    %v956 = vpop.permute.xlu0 %955
    %v973 = vsel %vm504, %v893, 0
    %v975 = vsel %vm504, %v894, 0
    %v977 = vsel %vm504, %v895, 0
    %v979 = vsel %vm504, %v896, 0
    %v981 = vsel %vm504, %v897, 0
    %v983 = vsel %vm504, %v898, 0
    %v985 = vsel %vm504, %v899, 0
    %v987 = vsel %vm504, %v900, 0
    %v989 = vsel %vm504, %v901, 0
    %v991 = vsel %vm504, %v902, 0
    %v993 = vsel %vm504, %v903, 0
    %v995 = vsel %vm504, %v904, 0
    %v997 = vsel %vm504, %v905, 0
    %v999 = vsel %vm504, %v906, 0
    %v1001 = vsel %vm504, %v907, 0
    %v1003 = vsel %vm504, %v908, 0
    %1005 = vmatpush.msra.mxu0 0.0
    %1006 = vmatpush.msra.mxu0 0.0
    %1007 = vmatpush.msra.mxu0 0.0
    %1008 = vmatpush.msra.mxu0 0.0
    %1009 = vmatpush.msra.mxu0 0.0
    %1010 = vmatpush.msra.mxu0 0.0
    %1011 = vmatpush.msra.mxu0 0.0
    %1012 = vmatpush.msra.mxu0 0.0
    %1013 = vmatpush.msra.mxu0 %v892
    %1014 = vmatpush.msra.mxu0 %v891
    %1015 = vmatpush.msra.mxu0 %v890
    %1016 = vmatpush.msra.mxu0 %v889
    %1017 = vmatpush.msra.mxu0 %v888
    %1018 = vmatpush.msra.mxu0 %v887
    %1019 = vmatpush.msra.mxu0 %v886
    %1020 = vmatpush.msra.mxu0 %v885
    %1021 = vmatmul.f32.gmra.mxu0 %v973
    %v1022 = vpop.f32.mrf.mxu0
    %v1023 = vadd.f32 %v926, %v1022
    %1024 = vmatmul.f32.gmra.mxu0 %v975
    %v1025 = vpop.f32.mrf.mxu0
    %v1026 = vadd.f32 %v928, %v1025
    %1027 = vmatmul.f32.gmra.mxu0 %v977
    %v1028 = vpop.f32.mrf.mxu0
    %v1029 = vadd.f32 %v930, %v1028
    %1030 = vmatmul.f32.gmra.mxu0 %v979
    %v1031 = vpop.f32.mrf.mxu0
    %v1032 = vadd.f32 %v932, %v1031
    %1033 = vmatmul.f32.gmra.mxu0 %v981
    %v1034 = vpop.f32.mrf.mxu0
    %v1035 = vadd.f32 %v934, %v1034
    %1036 = vmatmul.f32.gmra.mxu0 %v983
    %v1037 = vpop.f32.mrf.mxu0
    %v1038 = vadd.f32 %v936, %v1037
    %1039 = vmatmul.f32.gmra.mxu0 %v985
    %v1040 = vpop.f32.mrf.mxu0
    %v1041 = vadd.f32 %v938, %v1040
    %1042 = vmatmul.f32.gmra.mxu0 %v987
    %v1043 = vpop.f32.mrf.mxu0
    %v1044 = vadd.f32 %v940, %v1043
    %1045 = vmatmul.f32.gmra.mxu0 %v989
    %v1046 = vpop.f32.mrf.mxu0
    %v1047 = vadd.f32 %v942, %v1046
    %1048 = vmatmul.f32.gmra.mxu0 %v991
    %v1049 = vpop.f32.mrf.mxu0
    %v1050 = vadd.f32 %v944, %v1049
    %1051 = vmatmul.f32.gmra.mxu0 %v993
    %v1052 = vpop.f32.mrf.mxu0
    %v1053 = vadd.f32 %v946, %v1052
    %1054 = vmatmul.f32.gmra.mxu0 %v995
    %v1055 = vpop.f32.mrf.mxu0
    %v1056 = vadd.f32 %v948, %v1055
    %1057 = vmatmul.f32.gmra.mxu0 %v997
    %v1058 = vpop.f32.mrf.mxu0
    %v1059 = vadd.f32 %v950, %v1058
    %1060 = vmatmul.f32.gmra.mxu0 %v999
    %v1061 = vpop.f32.mrf.mxu0
    %v1062 = vadd.f32 %v952, %v1061
    %1063 = vmatmul.f32.gmra.mxu0 %v1001
    %v1064 = vpop.f32.mrf.mxu0
    %v1065 = vadd.f32 %v954, %v1064
    %1066 = vmatmul.f32.gmra.mxu0 %v1003
    %v1067 = vpop.f32.mrf.mxu0
    %v1068 = vadd.f32 %v956, %v1067
    %1069 = vdwg.mxu0
    %v1070 = vadd.f32 %v270, %v1023
    %v1071 = vadd.f32 %v273, %v1026
    %v1072 = vadd.f32 %v276, %v1029
    %v1073 = vadd.f32 %v279, %v1032
    %v1074 = vadd.f32 %v282, %v1035
    %v1075 = vadd.f32 %v285, %v1038
    %v1076 = vadd.f32 %v288, %v1041
    %v1077 = vadd.f32 %v291, %v1044
    %v1078 = vadd.f32 %v294, %v1047
    %v1079 = vadd.f32 %v297, %v1050
    %v1080 = vadd.f32 %v300, %v1053
    %v1081 = vadd.f32 %v303, %v1056
    %v1082 = vadd.f32 %v306, %v1059
    %v1083 = vadd.f32 %v309, %v1062
    %v1084 = vadd.f32 %v312, %v1065
    %v1085 = vadd.f32 %v315, %v1068
    %1086 = vst.msk [vmem:[%s5] sm:$0xff] %vm331, %v1070
    %1087 = vst.msk [vmem:[%s5 + $0x8] sm:$0xff] %vm331, %v1071
    %1088 = vst.msk [vmem:[%s5 + $0x10] sm:$0xff] %vm331, %v1072
    %1089 = vst.msk [vmem:[%s5 + $0x18] sm:$0xff] %vm331, %v1073
    %1090 = vst.msk [vmem:[%s5 + $0x20] sm:$0xff] %vm331, %v1074
    %1091 = vst.msk [vmem:[%s5 + $0x28] sm:$0xff] %vm331, %v1075
    %1092 = vst.msk [vmem:[%s5 + $0x30] sm:$0xff] %vm331, %v1076
    %1093 = vst.msk [vmem:[%s5 + $0x38] sm:$0xff] %vm331, %v1077
    %1094 = vst.msk [vmem:[%s5 + $0x40] sm:$0xff] %vm331, %v1078
    %1095 = vst.msk [vmem:[%s5 + $0x48] sm:$0xff] %vm331, %v1079
    %1096 = vst.msk [vmem:[%s5 + $0x50] sm:$0xff] %vm331, %v1080
    %1097 = vst.msk [vmem:[%s5 + $0x58] sm:$0xff] %vm331, %v1081
    %1098 = vst.msk [vmem:[%s5 + $0x60] sm:$0xff] %vm331, %v1082
    %1099 = vst.msk [vmem:[%s5 + $0x68] sm:$0xff] %vm331, %v1083
    %1100 = vst.msk [vmem:[%s5 + $0x70] sm:$0xff] %vm331, %v1084
    %1101 = vst.msk [vmem:[%s5 + $0x78] sm:$0xff] %vm331, %v1085
    %1102 = vst.msk [vmem:[%s6] sm:$0xff] %vm331, %v885
    %1103 = vst.msk [vmem:[%s6 + $0x8] sm:$0xff] %vm331, %v886
    %1104 = vst.msk [vmem:[%s6 + $0x10] sm:$0xff] %vm331, %v887
    %1105 = vst.msk [vmem:[%s6 + $0x18] sm:$0xff] %vm331, %v888
    %1106 = vst.msk [vmem:[%s6 + $0x20] sm:$0xff] %vm331, %v889
    %1107 = vst.msk [vmem:[%s6 + $0x28] sm:$0xff] %vm331, %v890
    %1108 = vst.msk [vmem:[%s6 + $0x30] sm:$0xff] %vm331, %v891
    %1109 = vst.msk [vmem:[%s6 + $0x38] sm:$0xff] %vm331, %v892
    %1110 = vst.msk [vmem:[#allocation5] sm:$0xff] %vm331, %v784
    %1111 = vst.msk [vmem:[#allocation5 + $0x8] sm:$0xff] %vm331, %v785
    %1112 = vst.msk [vmem:[#allocation5 + $0x10] sm:$0xff] %vm331, %v786
    %1113 = vst.msk [vmem:[#allocation5 + $0x18] sm:$0xff] %vm331, %v787
    %1114 = vst.msk [vmem:[#allocation6] sm:$0xff] %vm331, %v773
    %1115 = vst.msk [vmem:[#allocation6 + $0x8] sm:$0xff] %vm331, %v776
    %1116 = vst.msk [vmem:[#allocation6 + $0x10] sm:$0xff] %vm331, %v779
    %1117 = vst.msk [vmem:[#allocation6 + $0x18] sm:$0xff] %vm331, %v782
    // Predicated region
    $region26: #{tpu_custom_call.1} parent=1 // pred_check
      _
    $region27: #{tpu_custom_call.1} parent=1 // pred_check_branch
      %1119 = sbr.rel (0) target = $region29
    $region28: #{tpu_custom_call.1} parent=1 // pred_region
      _
    $region29: #{tpu_custom_call.1} parent=1 // pred_fallthru
      _
    // Predicated region
    $region30: #{tpu_custom_call.1} parent=1 // pred_check
      _
    $region31: #{tpu_custom_call.1} parent=1 // pred_check_branch
      %1121 = sbr.rel (0) target = $region33
    $region32: #{tpu_custom_call.1} parent=1 // pred_region
      _
    $region33: #{tpu_custom_call.1} parent=1 // pred_fallthru
      _
    // Predicated region
    $region34: #{tpu_custom_call.1} parent=1 // pred_check
      _
    $region35: #{tpu_custom_call.1} parent=1 // pred_check_branch
      %1123 = sbr.rel (0) target = $region37
    $region36: #{tpu_custom_call.1} parent=1 // pred_region
      %1125 = vsyncadd [#allocation4], 0
      %s1126 = sshll.u32 [#allocation5], 4
      %s1127 = int_to_ptr.vmem [resolvable:$true] %s1126
      %s1128 = sshll.u32 %s7, 4
      %s1129 = int_to_ptr.hbm [resolvable:$true] %s1128
      %1134 = dma.vmem_to_hbm [thread:$0]  %s1127, 512, %s1129, [#allocation4], 128, 128, 8
    $region37: #{tpu_custom_call.1} parent=1 // pred_fallthru
      _
    // Predicated region
    $region38: #{tpu_custom_call.1} parent=1 // pred_check
      _
    $region39: #{tpu_custom_call.1} parent=1 // pred_check_branch
      %1136 = sbr.rel (0) target = $region41
    $region40: #{tpu_custom_call.1} parent=1 // pred_region
      %1138 = vsyncadd [#allocation7], 0
      %s1139 = sshll.u32 [#allocation6], 4
      %s1140 = int_to_ptr.vmem [resolvable:$true] %s1139
      %s1141 = sshll.u32 %s8, 4
      %s1142 = int_to_ptr.hbm [resolvable:$true] %s1141
      %1147 = dma.vmem_to_hbm [thread:$0]  %s1140, 512, %s1142, [#allocation7], 128, 128, 8
    $region41: #{tpu_custom_call.1} parent=1 // pred_fallthru
      _
    // Predicated region
    $region42: #{tpu_custom_call.1} parent=1 // pred_check
      _
    $region43: #{tpu_custom_call.1} parent=1 // pred_check_branch
      %1149 = sbr.rel (0) target = $region45
    $region44: #{tpu_custom_call.1} parent=1 // pred_region
      _
    $region45: #{tpu_custom_call.1} parent=1 // pred_fallthru
      _
    // Predicated region
    $region46: #{tpu_custom_call.1} parent=1 // pred_check
      _
    $region47: #{tpu_custom_call.1} parent=1 // pred_check_branch
      %1151 = sbr.rel (0) target = $region49
    $region48: #{tpu_custom_call.1} parent=1 // pred_region
      _
    $region49: #{tpu_custom_call.1} parent=1 // pred_fallthru
      _
    // Predicated region
    $region50: #{tpu_custom_call.1} parent=1 // pred_check
      _
    $region51: #{tpu_custom_call.1} parent=1 // pred_check_branch
      %1153 = sbr.rel (0) target = $region53
    $region52: #{tpu_custom_call.1} parent=1 // pred_region
      %1155 = dma.done [#allocation4], 512
    $region53: #{tpu_custom_call.1} parent=1 // pred_fallthru
      _
    // Predicated region
    $region54: #{tpu_custom_call.1} parent=1 // pred_check
      _
    $region55: #{tpu_custom_call.1} parent=1 // pred_check_branch
      %1157 = sbr.rel (0) target = $region57
    $region56: #{tpu_custom_call.1} parent=1 // pred_region
      %1159 = dma.done [#allocation7], 512
    $region57: #{tpu_custom_call.1} parent=1 // pred_fallthru
      _
    %1160 = vsyncpa [#allocation3], 1
    %1161 = vsyncpa [#allocation4], 1
    %1162 = vsyncpa [#allocation7], 1

</llo_original>
